<compile_context>
chip_gen: v7x
topology: tpu7x:2x2x1
jax: 0.10.0
libtpu: 0.0.40
codegen_flags: <defaults>
</compile_context>

<pallas_src>
import jax
import jax.numpy as jnp
from jax.experimental import pallas as pl
from jax.experimental.pallas import tpu as pltpu

LANES = 128
SUBLANES = 8
MAX_BLOCK_ROWS = 512  # 512 x 128 f32 tile = 256 KiB per operand; safe on v5e/v6e/v7x


def _embedding_kernel(params_ref, y_ref, z_ref, out_ref):
    # params_ref: SMEM float32[4] = [mean0, std0, mean1, std1]
    # y_ref:      VMEM int32  [block_rows, 128]  (one batch element per lane)
    # z_ref:      VMEM float32[block_rows, 128]  (standard normal per element)
    # out_ref:    VMEM float32[block_rows, 128]
    mean0 = params_ref[0]
    std0 = params_ref[1]
    mean1 = params_ref[2]
    std1 = params_ref[3]

    y = y_ref[...]
    is0 = y == 0
    is1 = y == 1
    mean_sel = jnp.where(is0, mean0, jnp.where(is1, mean1, 0.0))
    std_sel = jnp.where(is0, std0, jnp.where(is1, std1, 0.0))
    out_ref[...] = mean_sel + std_sel * z_ref[...]


def embedding_forward(y, mean0, mean1, std0=1.0, std1=1.0, key=None):
    """y: int array [B] of class labels. Returns float32 [B, 1]."""
    if key is None:
        key = jax.random.PRNGKey(0)
    B = y.shape[0]

    # Lane-pack: one batch element per lane, rows on sublanes.
    rows = -(-B // LANES)
    rows = ((rows + SUBLANES - 1) // SUBLANES) * SUBLANES
    block_rows = min(MAX_BLOCK_ROWS, rows)
    rows_pad = ((rows + block_rows - 1) // block_rows) * block_rows
    total = rows_pad * LANES

    # Padded slots get label -1 -> mean=std=0 -> output 0 (discarded anyway).
    y_flat = jnp.full((total,), -1, dtype=jnp.int32).at[:B].set(y.astype(jnp.int32))
    y_packed = y_flat.reshape(rows_pad, LANES)

    # Standard-normal samples, one per lane-packed element.
    z = jax.random.normal(key, (rows_pad, LANES), dtype=jnp.float32)

    params = jnp.array([mean0, std0, mean1, std1], dtype=jnp.float32)

    grid = (rows_pad // block_rows,)
    out = pl.pallas_call(
        _embedding_kernel,
        out_shape=jax.ShapeDtypeStruct((rows_pad, LANES), jnp.float32),
        grid=grid,
        in_specs=[
            pl.BlockSpec(memory_space=pltpu.MemorySpace.SMEM),        # params
            pl.BlockSpec((block_rows, LANES), lambda i: (i, 0)),      # labels
            pl.BlockSpec((block_rows, LANES), lambda i: (i, 0)),      # normals
        ],
        out_specs=pl.BlockSpec((block_rows, LANES), lambda i: (i, 0)),
        compiler_params=pltpu.CompilerParams(
            dimension_semantics=("parallel",)),
    )(params, y_packed, z)

    return out.reshape(-1)[:B].reshape(B, 1)


if __name__ == "__main__":
    # Deterministic parameter init (module init: mean0=mean1=0.0, std0=std1=1.0).
    mean0 = jnp.float32(0.0)
    mean1 = jnp.float32(0.0)
    std0 = jnp.float32(1.0)
    std1 = jnp.float32(1.0)

    key = jax.random.PRNGKey(0)
    k_labels, k_noise = jax.random.split(key)

    B = 8
    y = jax.random.randint(k_labels, (B,), 0, 2, dtype=jnp.int32)  # labels in {0, 1}

    c_gen = embedding_forward(y, mean0, mean1, std0, std1, key=k_noise)
    jax.block_until_ready(c_gen)

    assert c_gen.shape == (B, 1), c_gen.shape
    assert c_gen.dtype == jnp.float32, c_gen.dtype
    assert bool(jnp.all(jnp.isfinite(c_gen)))
    print("KERNEL_OK")
</pallas_src>

<mosaic_0001>
module attributes {stable_mosaic.version = 11 : i64} {
  func.func @_embedding_kernel(%arg0: i32, %arg1: memref<4xf32, #tpu.memory_space<smem>>, %arg2: memref<8x128xi32, #tpu.memory_space<vmem>>, %arg3: memref<8x128xf32, #tpu.memory_space<vmem>>, %arg4: memref<8x128xf32, #tpu.memory_space<vmem>>) attributes {dimension_semantics = [#tpu.dimension_semantics<parallel>], iteration_bounds = array<i64: 1>, scalar_prefetch = 0 : i64, scratch_operands = 0 : i64, tpu.core_type = #tpu.core_type<tc>, window_params = [{transform_indices = @transform_0, window_bounds = array<i64: 4>}, {transform_indices = @transform_1, window_bounds = array<i64: 8, 128>}, {transform_indices = @transform_2, window_bounds = array<i64: 8, 128>}, {transform_indices = @transform_3, window_bounds = array<i64: 8, 128>}]} {
    %c0 = arith.constant 0 : index
    %0 = memref.load %arg1[%c0] : memref<4xf32, #tpu.memory_space<smem>>
    %c1 = arith.constant 1 : index
    %1 = memref.load %arg1[%c1] : memref<4xf32, #tpu.memory_space<smem>>
    %c2 = arith.constant 2 : index
    %2 = memref.load %arg1[%c2] : memref<4xf32, #tpu.memory_space<smem>>
    %c3 = arith.constant 3 : index
    %3 = memref.load %arg1[%c3] : memref<4xf32, #tpu.memory_space<smem>>
    %c0_0 = arith.constant 0 : index
    %c0_1 = arith.constant 0 : index
    %4 = vector.load %arg2[%c0_0, %c0_1] : memref<8x128xi32, #tpu.memory_space<vmem>>, vector<8x128xi32>
    %c0_i32 = arith.constant 0 : i32
    %5 = vector.broadcast %c0_i32 : i32 to vector<8x128xi32>
    %6 = arith.cmpi eq, %4, %5 : vector<8x128xi32>
    %c1_i32 = arith.constant 1 : i32
    %7 = vector.broadcast %c1_i32 : i32 to vector<8x128xi32>
    %8 = arith.cmpi eq, %4, %7 : vector<8x128xi32>
    %cst = arith.constant 0.000000e+00 : f32
    %9 = vector.broadcast %2 : f32 to vector<8x128xf32>
    %10 = vector.broadcast %cst : f32 to vector<8x128xf32>
    %11 = arith.select %8, %9, %10 : vector<8x128xi1>, vector<8x128xf32>
    %12 = vector.broadcast %0 : f32 to vector<8x128xf32>
    %13 = arith.select %6, %12, %11 : vector<8x128xi1>, vector<8x128xf32>
    %cst_2 = arith.constant 0.000000e+00 : f32
    %14 = vector.broadcast %3 : f32 to vector<8x128xf32>
    %15 = vector.broadcast %cst_2 : f32 to vector<8x128xf32>
    %16 = arith.select %8, %14, %15 : vector<8x128xi1>, vector<8x128xf32>
    %17 = vector.broadcast %1 : f32 to vector<8x128xf32>
    %18 = arith.select %6, %17, %16 : vector<8x128xi1>, vector<8x128xf32>
    %c0_3 = arith.constant 0 : index
    %c0_4 = arith.constant 0 : index
    %19 = vector.load %arg3[%c0_3, %c0_4] : memref<8x128xf32, #tpu.memory_space<vmem>>, vector<8x128xf32>
    %20 = arith.mulf %18, %19 : vector<8x128xf32>
    %21 = arith.addf %13, %20 : vector<8x128xf32>
    %c0_5 = arith.constant 0 : index
    %c0_6 = arith.constant 0 : index
    %22 = vector.load %arg4[%c0_5, %c0_6] : memref<8x128xf32, #tpu.memory_space<vmem>>, vector<8x128xf32>
    tpu.vector_store %arg4[%c0_5, %c0_6], %21 {strides = array<i32>} : memref<8x128xf32, #tpu.memory_space<vmem>>, vector<8x128xf32>,
    return
  }
  func.func @transform_0(%arg0: i32) -> i32 {
    %c0_i32 = arith.constant 0 : i32
    %c0_i32_0 = arith.constant 0 : i32
    return %c0_i32 : i32
  }
  func.func @transform_1(%arg0: i32) -> (i32, i32) {
    %c0_i32 = arith.constant 0 : i32
    %c0_i32_0 = arith.constant 0 : i32
    return %arg0, %c0_i32 : i32, i32
  }
  func.func @transform_2(%arg0: i32) -> (i32, i32) {
    %c0_i32 = arith.constant 0 : i32
    %c0_i32_0 = arith.constant 0 : i32
    return %arg0, %c0_i32 : i32, i32
  }
  func.func @transform_3(%arg0: i32) -> (i32, i32) {
    %c0_i32 = arith.constant 0 : i32
    %c0_i32_0 = arith.constant 0 : i32
    return %arg0, %c0_i32 : i32, i32
  }
}

</mosaic_0001>

<llo_original>
// kernel: tpu_custom_call.1
$region0: #{tpu_custom_call.1}
  #allocation0 [shape = 'u32[]', space=smem, size = 0x4, offset = 0x4, fixed_abs, tag = 'smem constant byte address 0x4 - core index']
  #allocation1 [shape = 'u32[144,128]{1,0:T(1,128)}', space=vmem, size = 0x12000, scoped, tag = 'internal scratch']
  %s0 = inlined_call_operand.hbm [shape: f32[4], index: 0, kind: input, shape index: {}]
  %s1 = inlined_call_operand.hbm [shape: s32[8,128], index: 1, kind: input, shape index: {}]
  %s2 = inlined_call_operand.hbm [shape: f32[8,128], index: 2, kind: input, shape index: {}]
  %s3 = inlined_call_operand.hbm [shape: f32[8,128], index: 3, kind: output, shape index: {}]
  %s4 = sld [smem:[#allocation0]]
  $region34: #{tpu_custom_call.1} parent=0
    _
  %s6 = ssub.s32 1, %s4
  %s7 = scalar_select 0, %s6, %s4
  $region1: #{tpu_custom_call.1} parent=0
    #allocation2 [shape = 'u8[512]{0}', space=smem, size = 0x200, scoped, tag = 'input window, operand 0, single buffered']
    #allocation3 [shape = 's32[1]{0}', space=sflag, size = 0x4, scoped, tag = 'scoped memory for tpu_custom_call.1']
    #allocation4 [shape = 's32[1]{0}', space=sflag, size = 0x4, scoped, tag = 'scoped memory for tpu_custom_call.1']
    #allocation5 [shape = 's32[1]{0}', space=sflag, size = 0x4, scoped, tag = 'scoped memory for tpu_custom_call.1']
    #allocation6 [shape = 'u8[4096]{0}', space=vmem, size = 0x1000, scoped, tag = 'input window, operand 1, single buffered']
    #allocation7 [shape = 'u8[4096]{0}', space=vmem, size = 0x1000, scoped, tag = 'input window, operand 2, single buffered']
    #allocation8 [shape = 's32[1]{0}', space=sflag, size = 0x4, scoped, tag = 'scoped memory for tpu_custom_call.1']
    #allocation9 [shape = 'u8[4096]{0}', space=vmem, size = 0x1000, scoped, tag = 'output window, operand 0, single buffered']
    %8 = vsyncpa [#allocation5], 0
    %9 = vsyncpa [#allocation3], 0
    %10 = vsyncpa [#allocation8], 0
    %11 = vsyncpa [#allocation4], 0
    // Predicated region
    $region2: #{tpu_custom_call.1} parent=1 // pred_check
      _
    $region3: #{tpu_custom_call.1} parent=1 // pred_check_branch
      %13 = sbr.rel (0) target = $region5
    $region4: #{tpu_custom_call.1} parent=1 // pred_region
      %s15 = ssub.s32 16, 16
      %16 = vsyncadd [#allocation5], %s15
      %19 = dma.hbm_to_smem %s0, 16, [#allocation2], [#allocation5]
    $region5: #{tpu_custom_call.1} parent=1 // pred_fallthru
      _
    // Predicated region
    $region6: #{tpu_custom_call.1} parent=1 // pred_check
      _
    $region7: #{tpu_custom_call.1} parent=1 // pred_check_branch
      %21 = sbr.rel (0) target = $region9
    $region8: #{tpu_custom_call.1} parent=1 // pred_region
      %s23 = ssub.s32 128, 128
      %24 = vsyncadd [#allocation3], %s23
      %s26 = sshll.u32 [#allocation6], 4
      %s27 = int_to_ptr.vmem [resolvable:$true] %s26
      %29 = dma.hbm_to_vmem [thread:$0]  %s1, 128, %s27, [#allocation3]
    $region9: #{tpu_custom_call.1} parent=1 // pred_fallthru
      _
    // Predicated region
    $region10: #{tpu_custom_call.1} parent=1 // pred_check
      _
    $region11: #{tpu_custom_call.1} parent=1 // pred_check_branch
      %31 = sbr.rel (0) target = $region13
    $region12: #{tpu_custom_call.1} parent=1 // pred_region
      %s33 = ssub.s32 128, 128
      %34 = vsyncadd [#allocation8], %s33
      %s36 = sshll.u32 [#allocation7], 4
      %s37 = int_to_ptr.vmem [resolvable:$true] %s36
      %39 = dma.hbm_to_vmem [thread:$0]  %s2, 128, %s37, [#allocation8]
    $region13: #{tpu_custom_call.1} parent=1 // pred_fallthru
      _
    // Predicated region
    $region14: #{tpu_custom_call.1} parent=1 // pred_check
      _
    $region15: #{tpu_custom_call.1} parent=1 // pred_check_branch
      %41 = sbr.rel (0) target = $region17
    $region16: #{tpu_custom_call.1} parent=1 // pred_region
      %42 = dma.done [#allocation5], 16
    $region17: #{tpu_custom_call.1} parent=1 // pred_fallthru
      _
    // Predicated region
    $region18: #{tpu_custom_call.1} parent=1 // pred_check
      _
    $region19: #{tpu_custom_call.1} parent=1 // pred_check_branch
      %44 = sbr.rel (0) target = $region21
    $region20: #{tpu_custom_call.1} parent=1 // pred_region
      %45 = dma.done [#allocation3], 128
    $region21: #{tpu_custom_call.1} parent=1 // pred_fallthru
      _
    // Predicated region
    $region22: #{tpu_custom_call.1} parent=1 // pred_check
      _
    $region23: #{tpu_custom_call.1} parent=1 // pred_check_branch
      %47 = sbr.rel (0) target = $region25
    $region24: #{tpu_custom_call.1} parent=1 // pred_region
      %48 = dma.done [#allocation8], 128
    $region25: #{tpu_custom_call.1} parent=1 // pred_fallthru
      _
    %49 = sfence
    %s50 = sld [smem:[#allocation2]]
    %s51 = sld [smem:[#allocation2 + $0x1]]
    %s52 = sld [smem:[#allocation2 + $0x2]]
    %s53 = sld [smem:[#allocation2 + $0x3]]
    %v54 = vld [vmem:[#allocation6] sm:$0xff]
    %vm55 = vcmp.eq.s32.totalorder %v54, 0
    %vm56 = vcmp.eq.s32.totalorder %v54, 1
    %v57 = vstv %s52
    %v58 = vsel %vm56, %v57, 0.0
    %v59 = vstv %s50
    %v60 = vsel %vm55, %v59, %v58
    %v61 = vstv %s53
    %v62 = vsel %vm56, %v61, 0.0
    %v63 = vstv %s51
    %v64 = vsel %vm55, %v63, %v62
    %v65 = vld [vmem:[#allocation7] sm:$0xff]
    %v66 = vmul.f32 %v64, %v65
    %v67 = vadd.f32 %v60, %v66
    %68 = vst [vmem:[#allocation9] sm:$0xff] %v67
    // Predicated region
    $region26: #{tpu_custom_call.1} parent=1 // pred_check
      _
    $region27: #{tpu_custom_call.1} parent=1 // pred_check_branch
      %70 = sbr.rel (0) target = $region29
    $region28: #{tpu_custom_call.1} parent=1 // pred_region
      %s72 = ssub.s32 128, 128
      %73 = vsyncadd [#allocation4], %s72
      %s75 = sshll.u32 [#allocation9], 4
      %s76 = int_to_ptr.vmem [resolvable:$true] %s75
      %78 = dma.vmem_to_hbm [thread:$0]  %s76, 128, %s3, [#allocation4]
    $region29: #{tpu_custom_call.1} parent=1 // pred_fallthru
      _
    // Predicated region
    $region30: #{tpu_custom_call.1} parent=1 // pred_check
      _
    $region31: #{tpu_custom_call.1} parent=1 // pred_check_branch
      %80 = sbr.rel (0) target = $region33
    $region32: #{tpu_custom_call.1} parent=1 // pred_region
      %81 = dma.done [#allocation4], 128
    $region33: #{tpu_custom_call.1} parent=1 // pred_fallthru
      _
    %82 = vsyncpa [#allocation3], 1
    %83 = vsyncpa [#allocation8], 1
    %84 = vsyncpa [#allocation4], 1
    %85 = vsyncpa [#allocation5], 1

</llo_original>
